<compile_context>
chip_gen: v5e
topology: v5e:2x2
jax: 0.10.0
libtpu: 0.0.40
codegen_flags: <defaults>
</compile_context>

<pallas_src>
import functools

import jax
import jax.numpy as jnp
import numpy as np
from jax.experimental import pallas as pl
from jax.experimental.pallas import tpu as pltpu

# ----------------------------- config ---------------------------------------
VOCAB = 50          # input_size
EMBED = 32          # embed_size
HIDDEN = 32         # hidden_size
NUM_LAYERS = 2      # num_layers (wavefront kernel is specialized to 2)
DROPOUT = 0.0       # dropout (p=0 -> identity)
SEQ_LEN = 8
BATCH = 4


# --------------------------- fused encoder kernel ----------------------------
def _encoder_kernel(seq_len, b_pad, hidden, vocab_pad,
                    tok_ref, ptab_ref, rhs_ref, out_ref):
    """Whole encoder forward (both LSTM layers, wavefront-fused) in one invocation.

    Inputs:
      tok_ref  (S*Bp, 1) int32   flattened padded token ids (time-major)
      ptab_ref (Vp, 8H)  f32     [emb @ Wih0^T + b0 | b1 bcast], gate-col permuted
      rhs_ref  (2H, 8H)  f32     [[Whh0^T, Wih1^T], [0, Whh1^T]], gate-col permuted
    Output:
      out_ref  (Bp, 4H)  f32     packed [h0 | h1 | c0 | c1]
    """
    H = hidden
    sb = seq_len * b_pad

    # Fused embedding gather + layer-0 input projection + both layers' biases:
    # one-hot(tokens) @ ptab  ==  [emb[tok] @ Wih0^T + b0 | b1]   per (t, b) row.
    toks = tok_ref[...]                                            # (S*Bp, 1)
    vocab_iota = jax.lax.broadcasted_iota(jnp.int32, (sb, vocab_pad), 1)
    onehot = jnp.where(vocab_iota == toks, 1.0, 0.0)               # (S*Bp, Vp)
    gx = jnp.dot(onehot, ptab_ref[...],
                 preferred_element_type=jnp.float32)               # (S*Bp, 8H)

    rhs = rhs_ref[...]                                             # (2H, 8H)

    # lane mask selecting the layer-0 half of the packed (Bp, 2H) state
    lane = jax.lax.broadcasted_iota(jnp.int32, (b_pad, 2 * H), 1)
    l0_mask = lane < H

    h = jnp.zeros((b_pad, 2 * H), jnp.float32)                     # [h0 | h1]
    c = jnp.zeros((b_pad, 2 * H), jnp.float32)                     # [c0 | c1]

    # Wavefront recurrence: wave w = layer-0 step w + layer-1 step w-1,
    # one (Bp,2H)x(2H,8H) matmul per wave, S + L - 1 = seq_len + 1 waves.
    # Fully unrolled (static trip count) => straight-line code for the LLO scheduler.
    for w in range(seq_len + 1):
        we = min(w, seq_len - 1)                                   # clamp for last wave
        gxw = gx[we * b_pad:(we + 1) * b_pad, :]                   # (Bp, 8H)
        if w == 0:
            gates = gxw                                            # h == 0 -> skip the dot
        else:
            gates = gxw + jnp.dot(h, rhs, preferred_element_type=jnp.float32)

        # Whole-slab nonlinearities (2 EUP pushes per wave instead of 8 slices).
        # Column layout (after prep-time permutation): [i0 i1 | f0 f1 | g0 g1 | o0 o1].
        sig = jax.nn.sigmoid(gates)                                # (Bp, 8H)
        th = jnp.tanh(gates)                                       # (Bp, 8H)
        i_g = sig[:, 0 * 2 * H:1 * 2 * H]
        f_g = sig[:, 1 * 2 * H:2 * 2 * H]
        g_g = th[:, 2 * 2 * H:3 * 2 * H]
        o_g = sig[:, 3 * 2 * H:4 * 2 * H]

        c_new = f_g * c + i_g * g_g                                # (Bp, 2H)
        h_new = o_g * jnp.tanh(c_new)                              # (Bp, 2H)

        if w == 0:                      # boundary: only layer 0 active
            c = jnp.where(l0_mask, c_new, c)
            h = jnp.where(l0_mask, h_new, h)
        elif w == seq_len:              # boundary: only layer 1 active
            c = jnp.where(l0_mask, c, c_new)
            h = jnp.where(l0_mask, h, h_new)
        else:
            c = c_new
            h = h_new

    # Lane-dense (8, 128) output -> single unmasked full-vreg store.
    out_ref[...] = jnp.concatenate([h, c], axis=1)                 # [h0 h1 c0 c1]


def make_encoder_call(seq_len, b_pad, hidden, vocab_pad):
    kernel = functools.partial(_encoder_kernel, seq_len, b_pad, hidden, vocab_pad)
    sb = seq_len * b_pad
    return pl.pallas_call(
        kernel,
        out_shape=jax.ShapeDtypeStruct((b_pad, 4 * hidden), jnp.float32),
        grid_spec=pltpu.PrefetchScalarGridSpec(
            num_scalar_prefetch=0,
            grid=(1,),                  # single invocation; recurrence is in-kernel
            in_specs=[
                pl.BlockSpec((sb, 1), lambda i: (0, 0)),                     # tokens
                pl.BlockSpec((vocab_pad, 8 * hidden), lambda i: (0, 0)),     # fused table
                pl.BlockSpec((2 * hidden, 8 * hidden), lambda i: (0, 0)),    # block RHS
            ],
            out_specs=pl.BlockSpec((b_pad, 4 * hidden), lambda i: (0, 0)),
        ),
        compiler_params=pltpu.CompilerParams(
            dimension_semantics=("arbitrary",)),
    )


# ------------------------------- Encoder -------------------------------------
def init_encoder_params(key, vocab, embed, hidden, num_layers):
    params = {}
    k_emb, key = jax.random.split(key)
    params["embedding"] = jax.random.normal(k_emb, (vocab, embed), jnp.float32)
    bound = 1.0 / np.sqrt(hidden)
    layers = []
    for l in range(num_layers):
        in_dim = embed if l == 0 else hidden
        k1, k2, k3, k4, key = jax.random.split(key, 5)
        layers.append(dict(
            w_ih=jax.random.uniform(k1, (4 * hidden, in_dim), jnp.float32, -bound, bound),
            w_hh=jax.random.uniform(k2, (4 * hidden, hidden), jnp.float32, -bound, bound),
            b_ih=jax.random.uniform(k3, (4 * hidden,), jnp.float32, -bound, bound),
            b_hh=jax.random.uniform(k4, (4 * hidden,), jnp.float32, -bound, bound),
        ))
    params["lstm"] = layers
    return params


def prepare_encoder_params(params):
    """One-time layout prep: fused embedding/projection table, block recurrent RHS,
    gate-column permutation, vocab padding.  All done once at parameter-prep time."""
    emb = params["embedding"]                         # (V, E)
    layers = params["lstm"]
    assert len(layers) == 2, "wavefront kernel is specialized to num_layers=2"
    l0, l1 = layers
    H = l0["w_hh"].shape[1]
    V = emb.shape[0]
    Vp = ((V + 7) // 8) * 8                           # sublane-align the vocab dim

    b0 = l0["b_ih"] + l0["b_hh"]                      # (4H,)
    b1 = l1["b_ih"] + l1["b_hh"]                      # (4H,)

    # layer-0 gate-x table (token -> gate pre-activation incl. bias), plus
    # layer-1 bias broadcast so one matmul yields both layers' additive terms.
    gx_tab = emb @ l0["w_ih"].T + b0[None, :]                                  # (V, 4H)
    ptab = jnp.concatenate([gx_tab, jnp.tile(b1[None, :], (V, 1))], axis=1)    # (V, 8H)
    ptab = jnp.pad(ptab, ((0, Vp - V), (0, 0)))                                # (Vp, 8H)

    # block recurrent RHS: rows [h0 | h1], cols [layer-0 gates | layer-1 gates]
    top = jnp.concatenate([l0["w_hh"].T, l1["w_ih"].T], axis=1)                # (H, 8H)
    bot = jnp.concatenate([jnp.zeros((H, 4 * H), jnp.float32), l1["w_hh"].T], axis=1)
    rhs = jnp.concatenate([top, bot], axis=0)                                  # (2H, 8H)

    # permute gate column blocks [i0 f0 g0 o0 i1 f1 g1 o1] -> [i0 i1 f0 f1 g0 g1 o0 o1]
    perm = (0, 4, 1, 5, 2, 6, 3, 7)

    def permute_cols(m):
        return jnp.concatenate([m[:, p * H:(p + 1) * H] for p in perm], axis=1)

    return {"ptab": permute_cols(ptab), "rhs": permute_cols(rhs)}


@jax.jit
def encoder_forward(prepped, x_tokens):
    """x_tokens: (S, B) int32. Returns (hidden, cell) each (num_layers, B, H)."""
    S, B = x_tokens.shape
    b_pad = ((B + 7) // 8) * 8                        # pad batch to the f32 sublane tile
    ptab = prepped["ptab"]
    rhs = prepped["rhs"]
    H = rhs.shape[0] // 2
    Vp = ptab.shape[0]

    tok = jnp.pad(x_tokens.astype(jnp.int32), ((0, 0), (0, b_pad - B)))
    tok = tok.reshape(S * b_pad, 1)                   # time-major, batch-minor

    call = make_encoder_call(S, b_pad, H, Vp)
    out = call(tok, ptab, rhs)                        # (Bp, 4H) = [h0 h1 c0 c1]

    hidden = jnp.stack([out[:B, 0 * H:1 * H], out[:B, 1 * H:2 * H]], axis=0)
    cell = jnp.stack([out[:B, 2 * H:3 * H], out[:B, 3 * H:4 * H]], axis=0)
    return hidden, cell


# --------------------------- pure-JAX reference ------------------------------
def lstm_layer_ref(x_seq, w_ih, w_hh, b_ih, b_hh):
    H = w_hh.shape[1]
    B = x_seq.shape[1]

    def step(carry, x_t):
        h, c = carry
        gates = x_t @ w_ih.T + h @ w_hh.T + b_ih + b_hh
        i = jax.nn.sigmoid(gates[:, 0 * H:1 * H])
        f = jax.nn.sigmoid(gates[:, 1 * H:2 * H])
        g = jnp.tanh(gates[:, 2 * H:3 * H])
        o = jax.nn.sigmoid(gates[:, 3 * H:4 * H])
        c = f * c + i * g
        h = o * jnp.tanh(c)
        return (h, c), h

    init = (jnp.zeros((B, H), jnp.float32), jnp.zeros((B, H), jnp.float32))
    (h_n, c_n), outs = jax.lax.scan(step, init, x_seq)
    return outs, h_n, c_n


def encoder_ref(params, x_tokens):
    emb = jnp.take(params["embedding"], x_tokens, axis=0)
    inp = emb
    hs, cs = [], []
    for layer in params["lstm"]:
        out, h_n, c_n = lstm_layer_ref(inp, layer["w_ih"], layer["w_hh"],
                                       layer["b_ih"], layer["b_hh"])
        inp = out
        hs.append(h_n)
        cs.append(c_n)
    return jnp.stack(hs, axis=0), jnp.stack(cs, axis=0)


# ----------------------------------- main ------------------------------------
if __name__ == "__main__":
    key = jax.random.PRNGKey(0)
    k_params, k_tokens = jax.random.split(key)

    params = init_encoder_params(k_params, VOCAB, EMBED, HIDDEN, NUM_LAYERS)
    prepped = prepare_encoder_params(params)
    x = jax.random.randint(k_tokens, (SEQ_LEN, BATCH), 0, VOCAB, dtype=jnp.int32)

    hidden, cell = encoder_forward(prepped, x)
    hidden, cell = jax.block_until_ready((hidden, cell))

    # sanity check against a pure-JAX reference on the raw (PyTorch-layout) params
    h_ref, c_ref = encoder_ref(params, x)
    np.testing.assert_allclose(np.asarray(hidden), np.asarray(h_ref),
                               rtol=1e-5, atol=1e-5)
    np.testing.assert_allclose(np.asarray(cell), np.asarray(c_ref),
                               rtol=1e-5, atol=1e-5)

    assert hidden.shape == (NUM_LAYERS, BATCH, HIDDEN)
    assert cell.shape == (NUM_LAYERS, BATCH, HIDDEN)
    print("KERNEL_OK")
</pallas_src>

<mosaic_0001>
module attributes {stable_mosaic.version = 11 : i64} {
  func.func @_encoder_kernel(%arg0: i32, %arg1: memref<64x1xi32, #tpu.memory_space<vmem>>, %arg2: memref<56x256xf32, #tpu.memory_space<vmem>>, %arg3: memref<64x256xf32, #tpu.memory_space<vmem>>, %arg4: memref<8x128xf32, #tpu.memory_space<vmem>>) attributes {dimension_semantics = [#tpu.dimension_semantics<arbitrary>], iteration_bounds = array<i64: 1>, scalar_prefetch = 0 : i64, scratch_operands = 0 : i64, tpu.core_type = #tpu.core_type<tc>, window_params = [{pipeline_mode = #tpu.pipeline_mode<synchronous>, transform_indices = @transform_0, window_bounds = array<i64: 64, 1>}, {pipeline_mode = #tpu.pipeline_mode<synchronous>, transform_indices = @transform_1, window_bounds = array<i64: 56, 256>}, {pipeline_mode = #tpu.pipeline_mode<synchronous>, transform_indices = @transform_2, window_bounds = array<i64: 64, 256>}, {pipeline_mode = #tpu.pipeline_mode<synchronous>, transform_indices = @transform_3, window_bounds = array<i64: 8, 128>}]} {
    %c0 = arith.constant 0 : index
    %c0_0 = arith.constant 0 : index
    %0 = vector.load %arg1[%c0, %c0_0] : memref<64x1xi32, #tpu.memory_space<vmem>>, vector<64x1xi32>
    %1 = tpu.iota {dimensions = array<i32: 1>} : vector<64x56xi32>
    %2 = vector.broadcast %0 : vector<64x1xi32> to vector<64x56xi32>
    %3 = arith.cmpi eq, %1, %2 : vector<64x56xi32>
    %cst = arith.constant 1.000000e+00 : f32
    %cst_1 = arith.constant 0.000000e+00 : f32
    %4 = vector.broadcast %cst : f32 to vector<64x56xf32>
    %5 = vector.broadcast %cst_1 : f32 to vector<64x56xf32>
    %6 = arith.select %3, %4, %5 : vector<64x56xi1>, vector<64x56xf32>
    %c0_2 = arith.constant 0 : index
    %c0_3 = arith.constant 0 : index
    %7 = vector.load %arg2[%c0_2, %c0_3] : memref<56x256xf32, #tpu.memory_space<vmem>>, vector<56x256xf32>
    %cst_4 = arith.constant dense<0.000000e+00> : vector<64x256xf32>
    %8 = tpu.matmul %6, %7, %cst_4 {dimension_numbers = #tpu.dot_dimension_numbers<[1], [0], [0], [1], [0, 0, 1, 1], [], []>} : vector<64x56xf32>, vector<56x256xf32>, vector<64x256xf32> -> vector<64x256xf32>
    %c0_5 = arith.constant 0 : index
    %c0_6 = arith.constant 0 : index
    %9 = vector.load %arg3[%c0_5, %c0_6] : memref<64x256xf32, #tpu.memory_space<vmem>>, vector<64x256xf32>
    %10 = tpu.iota {dimensions = array<i32: 1>} : vector<8x64xi32>
    %c32_i32 = arith.constant 32 : i32
    %11 = vector.broadcast %c32_i32 : i32 to vector<8x64xi32>
    %12 = arith.cmpi slt, %10, %11 : vector<8x64xi32>
    %cst_7 = arith.constant 0.000000e+00 : f32
    %13 = vector.broadcast %cst_7 : f32 to vector<8x64xf32>
    %cst_8 = arith.constant 0.000000e+00 : f32
    %14 = vector.broadcast %cst_8 : f32 to vector<8x64xf32>
    %15 = vector.extract_strided_slice %8 {offsets = [0, 0], sizes = [8, 256], strides = [1, 1]} : vector<64x256xf32> to vector<8x256xf32>
    %16 = arith.negf %15 : vector<8x256xf32>
    %17 = math.exp %16 : vector<8x256xf32>
    %cst_9 = arith.constant 1.000000e+00 : f32
    %18 = vector.broadcast %cst_9 : f32 to vector<8x256xf32>
    %19 = arith.addf %18, %17 : vector<8x256xf32>
    %20 = arith.divf %18, %19 : vector<8x256xf32>
    %21 = math.tanh %15 : vector<8x256xf32>
    %22 = vector.extract_strided_slice %20 {offsets = [0, 0], sizes = [8, 64], strides = [1, 1]} : vector<8x256xf32> to vector<8x64xf32>
    %23 = vector.extract_strided_slice %20 {offsets = [0, 64], sizes = [8, 64], strides = [1, 1]} : vector<8x256xf32> to vector<8x64xf32>
    %24 = vector.extract_strided_slice %21 {offsets = [0, 128], sizes = [8, 64], strides = [1, 1]} : vector<8x256xf32> to vector<8x64xf32>
    %25 = vector.extract_strided_slice %20 {offsets = [0, 192], sizes = [8, 64], strides = [1, 1]} : vector<8x256xf32> to vector<8x64xf32>
    %26 = arith.mulf %23, %14 : vector<8x64xf32>
    %27 = arith.mulf %22, %24 : vector<8x64xf32>
    %28 = arith.addf %26, %27 : vector<8x64xf32>
    %29 = math.tanh %28 : vector<8x64xf32>
    %30 = arith.mulf %25, %29 : vector<8x64xf32>
    %31 = arith.select %12, %28, %14 : vector<8x64xi1>, vector<8x64xf32>
    %32 = arith.select %12, %30, %13 : vector<8x64xi1>, vector<8x64xf32>
    %33 = vector.extract_strided_slice %8 {offsets = [8, 0], sizes = [8, 256], strides = [1, 1]} : vector<64x256xf32> to vector<8x256xf32>
    %cst_10 = arith.constant dense<0.000000e+00> : vector<8x256xf32>
    %34 = tpu.matmul %32, %9, %cst_10 {dimension_numbers = #tpu.dot_dimension_numbers<[1], [0], [0], [1], [0, 0, 1, 1], [], []>} : vector<8x64xf32>, vector<64x256xf32>, vector<8x256xf32> -> vector<8x256xf32>
    %35 = arith.addf %33, %34 : vector<8x256xf32>
    %36 = arith.negf %35 : vector<8x256xf32>
    %37 = math.exp %36 : vector<8x256xf32>
    %cst_11 = arith.constant 1.000000e+00 : f32
    %38 = vector.broadcast %cst_11 : f32 to vector<8x256xf32>
    %39 = arith.addf %38, %37 : vector<8x256xf32>
    %40 = arith.divf %38, %39 : vector<8x256xf32>
    %41 = math.tanh %35 : vector<8x256xf32>
    %42 = vector.extract_strided_slice %40 {offsets = [0, 0], sizes = [8, 64], strides = [1, 1]} : vector<8x256xf32> to vector<8x64xf32>
    %43 = vector.extract_strided_slice %40 {offsets = [0, 64], sizes = [8, 64], strides = [1, 1]} : vector<8x256xf32> to vector<8x64xf32>
    %44 = vector.extract_strided_slice %41 {offsets = [0, 128], sizes = [8, 64], strides = [1, 1]} : vector<8x256xf32> to vector<8x64xf32>
    %45 = vector.extract_strided_slice %40 {offsets = [0, 192], sizes = [8, 64], strides = [1, 1]} : vector<8x256xf32> to vector<8x64xf32>
    %46 = arith.mulf %43, %31 : vector<8x64xf32>
    %47 = arith.mulf %42, %44 : vector<8x64xf32>
    %48 = arith.addf %46, %47 : vector<8x64xf32>
    %49 = math.tanh %48 : vector<8x64xf32>
    %50 = arith.mulf %45, %49 : vector<8x64xf32>
    %51 = vector.extract_strided_slice %8 {offsets = [16, 0], sizes = [8, 256], strides = [1, 1]} : vector<64x256xf32> to vector<8x256xf32>
    %cst_12 = arith.constant dense<0.000000e+00> : vector<8x256xf32>
    %52 = tpu.matmul %50, %9, %cst_12 {dimension_numbers = #tpu.dot_dimension_numbers<[1], [0], [0], [1], [0, 0, 1, 1], [], []>} : vector<8x64xf32>, vector<64x256xf32>, vector<8x256xf32> -> vector<8x256xf32>
    %53 = arith.addf %51, %52 : vector<8x256xf32>
    %54 = arith.negf %53 : vector<8x256xf32>
    %55 = math.exp %54 : vector<8x256xf32>
    %cst_13 = arith.constant 1.000000e+00 : f32
    %56 = vector.broadcast %cst_13 : f32 to vector<8x256xf32>
    %57 = arith.addf %56, %55 : vector<8x256xf32>
    %58 = arith.divf %56, %57 : vector<8x256xf32>
    %59 = math.tanh %53 : vector<8x256xf32>
    %60 = vector.extract_strided_slice %58 {offsets = [0, 0], sizes = [8, 64], strides = [1, 1]} : vector<8x256xf32> to vector<8x64xf32>
    %61 = vector.extract_strided_slice %58 {offsets = [0, 64], sizes = [8, 64], strides = [1, 1]} : vector<8x256xf32> to vector<8x64xf32>
    %62 = vector.extract_strided_slice %59 {offsets = [0, 128], sizes = [8, 64], strides = [1, 1]} : vector<8x256xf32> to vector<8x64xf32>
    %63 = vector.extract_strided_slice %58 {offsets = [0, 192], sizes = [8, 64], strides = [1, 1]} : vector<8x256xf32> to vector<8x64xf32>
    %64 = arith.mulf %61, %48 : vector<8x64xf32>
    %65 = arith.mulf %60, %62 : vector<8x64xf32>
    %66 = arith.addf %64, %65 : vector<8x64xf32>
    %67 = math.tanh %66 : vector<8x64xf32>
    %68 = arith.mulf %63, %67 : vector<8x64xf32>
    %69 = vector.extract_strided_slice %8 {offsets = [24, 0], sizes = [8, 256], strides = [1, 1]} : vector<64x256xf32> to vector<8x256xf32>
    %cst_14 = arith.constant dense<0.000000e+00> : vector<8x256xf32>
    %70 = tpu.matmul %68, %9, %cst_14 {dimension_numbers = #tpu.dot_dimension_numbers<[1], [0], [0], [1], [0, 0, 1, 1], [], []>} : vector<8x64xf32>, vector<64x256xf32>, vector<8x256xf32> -> vector<8x256xf32>
    %71 = arith.addf %69, %70 : vector<8x256xf32>
    %72 = arith.negf %71 : vector<8x256xf32>
    %73 = math.exp %72 : vector<8x256xf32>
    %cst_15 = arith.constant 1.000000e+00 : f32
    %74 = vector.broadcast %cst_15 : f32 to vector<8x256xf32>
    %75 = arith.addf %74, %73 : vector<8x256xf32>
    %76 = arith.divf %74, %75 : vector<8x256xf32>
    %77 = math.tanh %71 : vector<8x256xf32>
    %78 = vector.extract_strided_slice %76 {offsets = [0, 0], sizes = [8, 64], strides = [1, 1]} : vector<8x256xf32> to vector<8x64xf32>
    %79 = vector.extract_strided_slice %76 {offsets = [0, 64], sizes = [8, 64], strides = [1, 1]} : vector<8x256xf32> to vector<8x64xf32>
    %80 = vector.extract_strided_slice %77 {offsets = [0, 128], sizes = [8, 64], strides = [1, 1]} : vector<8x256xf32> to vector<8x64xf32>
    %81 = vector.extract_strided_slice %76 {offsets = [0, 192], sizes = [8, 64], strides = [1, 1]} : vector<8x256xf32> to vector<8x64xf32>
    %82 = arith.mulf %79, %66 : vector<8x64xf32>
    %83 = arith.mulf %78, %80 : vector<8x64xf32>
    %84 = arith.addf %82, %83 : vector<8x64xf32>
    %85 = math.tanh %84 : vector<8x64xf32>
    %86 = arith.mulf %81, %85 : vector<8x64xf32>
    %87 = vector.extract_strided_slice %8 {offsets = [32, 0], sizes = [8, 256], strides = [1, 1]} : vector<64x256xf32> to vector<8x256xf32>
    %cst_16 = arith.constant dense<0.000000e+00> : vector<8x256xf32>
    %88 = tpu.matmul %86, %9, %cst_16 {dimension_numbers = #tpu.dot_dimension_numbers<[1], [0], [0], [1], [0, 0, 1, 1], [], []>} : vector<8x64xf32>, vector<64x256xf32>, vector<8x256xf32> -> vector<8x256xf32>
    %89 = arith.addf %87, %88 : vector<8x256xf32>
    %90 = arith.negf %89 : vector<8x256xf32>
    %91 = math.exp %90 : vector<8x256xf32>
    %cst_17 = arith.constant 1.000000e+00 : f32
    %92 = vector.broadcast %cst_17 : f32 to vector<8x256xf32>
    %93 = arith.addf %92, %91 : vector<8x256xf32>
    %94 = arith.divf %92, %93 : vector<8x256xf32>
    %95 = math.tanh %89 : vector<8x256xf32>
    %96 = vector.extract_strided_slice %94 {offsets = [0, 0], sizes = [8, 64], strides = [1, 1]} : vector<8x256xf32> to vector<8x64xf32>
    %97 = vector.extract_strided_slice %94 {offsets = [0, 64], sizes = [8, 64], strides = [1, 1]} : vector<8x256xf32> to vector<8x64xf32>
    %98 = vector.extract_strided_slice %95 {offsets = [0, 128], sizes = [8, 64], strides = [1, 1]} : vector<8x256xf32> to vector<8x64xf32>
    %99 = vector.extract_strided_slice %94 {offsets = [0, 192], sizes = [8, 64], strides = [1, 1]} : vector<8x256xf32> to vector<8x64xf32>
    %100 = arith.mulf %97, %84 : vector<8x64xf32>
    %101 = arith.mulf %96, %98 : vector<8x64xf32>
    %102 = arith.addf %100, %101 : vector<8x64xf32>
    %103 = math.tanh %102 : vector<8x64xf32>
    %104 = arith.mulf %99, %103 : vector<8x64xf32>
    %105 = vector.extract_strided_slice %8 {offsets = [40, 0], sizes = [8, 256], strides = [1, 1]} : vector<64x256xf32> to vector<8x256xf32>
    %cst_18 = arith.constant dense<0.000000e+00> : vector<8x256xf32>
    %106 = tpu.matmul %104, %9, %cst_18 {dimension_numbers = #tpu.dot_dimension_numbers<[1], [0], [0], [1], [0, 0, 1, 1], [], []>} : vector<8x64xf32>, vector<64x256xf32>, vector<8x256xf32> -> vector<8x256xf32>
    %107 = arith.addf %105, %106 : vector<8x256xf32>
    %108 = arith.negf %107 : vector<8x256xf32>
    %109 = math.exp %108 : vector<8x256xf32>
    %cst_19 = arith.constant 1.000000e+00 : f32
    %110 = vector.broadcast %cst_19 : f32 to vector<8x256xf32>
    %111 = arith.addf %110, %109 : vector<8x256xf32>
    %112 = arith.divf %110, %111 : vector<8x256xf32>
    %113 = math.tanh %107 : vector<8x256xf32>
    %114 = vector.extract_strided_slice %112 {offsets = [0, 0], sizes = [8, 64], strides = [1, 1]} : vector<8x256xf32> to vector<8x64xf32>
    %115 = vector.extract_strided_slice %112 {offsets = [0, 64], sizes = [8, 64], strides = [1, 1]} : vector<8x256xf32> to vector<8x64xf32>
    %116 = vector.extract_strided_slice %113 {offsets = [0, 128], sizes = [8, 64], strides = [1, 1]} : vector<8x256xf32> to vector<8x64xf32>
    %117 = vector.extract_strided_slice %112 {offsets = [0, 192], sizes = [8, 64], strides = [1, 1]} : vector<8x256xf32> to vector<8x64xf32>
    %118 = arith.mulf %115, %102 : vector<8x64xf32>
    %119 = arith.mulf %114, %116 : vector<8x64xf32>
    %120 = arith.addf %118, %119 : vector<8x64xf32>
    %121 = math.tanh %120 : vector<8x64xf32>
    %122 = arith.mulf %117, %121 : vector<8x64xf32>
    %123 = vector.extract_strided_slice %8 {offsets = [48, 0], sizes = [8, 256], strides = [1, 1]} : vector<64x256xf32> to vector<8x256xf32>
    %cst_20 = arith.constant dense<0.000000e+00> : vector<8x256xf32>
    %124 = tpu.matmul %122, %9, %cst_20 {dimension_numbers = #tpu.dot_dimension_numbers<[1], [0], [0], [1], [0, 0, 1, 1], [], []>} : vector<8x64xf32>, vector<64x256xf32>, vector<8x256xf32> -> vector<8x256xf32>
    %125 = arith.addf %123, %124 : vector<8x256xf32>
    %126 = arith.negf %125 : vector<8x256xf32>
    %127 = math.exp %126 : vector<8x256xf32>
    %cst_21 = arith.constant 1.000000e+00 : f32
    %128 = vector.broadcast %cst_21 : f32 to vector<8x256xf32>
    %129 = arith.addf %128, %127 : vector<8x256xf32>
    %130 = arith.divf %128, %129 : vector<8x256xf32>
    %131 = math.tanh %125 : vector<8x256xf32>
    %132 = vector.extract_strided_slice %130 {offsets = [0, 0], sizes = [8, 64], strides = [1, 1]} : vector<8x256xf32> to vector<8x64xf32>
    %133 = vector.extract_strided_slice %130 {offsets = [0, 64], sizes = [8, 64], strides = [1, 1]} : vector<8x256xf32> to vector<8x64xf32>
    %134 = vector.extract_strided_slice %131 {offsets = [0, 128], sizes = [8, 64], strides = [1, 1]} : vector<8x256xf32> to vector<8x64xf32>
    %135 = vector.extract_strided_slice %130 {offsets = [0, 192], sizes = [8, 64], strides = [1, 1]} : vector<8x256xf32> to vector<8x64xf32>
    %136 = arith.mulf %133, %120 : vector<8x64xf32>
    %137 = arith.mulf %132, %134 : vector<8x64xf32>
    %138 = arith.addf %136, %137 : vector<8x64xf32>
    %139 = math.tanh %138 : vector<8x64xf32>
    %140 = arith.mulf %135, %139 : vector<8x64xf32>
    %141 = vector.extract_strided_slice %8 {offsets = [56, 0], sizes = [8, 256], strides = [1, 1]} : vector<64x256xf32> to vector<8x256xf32>
    %cst_22 = arith.constant dense<0.000000e+00> : vector<8x256xf32>
    %142 = tpu.matmul %140, %9, %cst_22 {dimension_numbers = #tpu.dot_dimension_numbers<[1], [0], [0], [1], [0, 0, 1, 1], [], []>} : vector<8x64xf32>, vector<64x256xf32>, vector<8x256xf32> -> vector<8x256xf32>
    %143 = arith.addf %141, %142 : vector<8x256xf32>
    %144 = arith.negf %143 : vector<8x256xf32>
    %145 = math.exp %144 : vector<8x256xf32>
    %cst_23 = arith.constant 1.000000e+00 : f32
    %146 = vector.broadcast %cst_23 : f32 to vector<8x256xf32>
    %147 = arith.addf %146, %145 : vector<8x256xf32>
    %148 = arith.divf %146, %147 : vector<8x256xf32>
    %149 = math.tanh %143 : vector<8x256xf32>
    %150 = vector.extract_strided_slice %148 {offsets = [0, 0], sizes = [8, 64], strides = [1, 1]} : vector<8x256xf32> to vector<8x64xf32>
    %151 = vector.extract_strided_slice %148 {offsets = [0, 64], sizes = [8, 64], strides = [1, 1]} : vector<8x256xf32> to vector<8x64xf32>
    %152 = vector.extract_strided_slice %149 {offsets = [0, 128], sizes = [8, 64], strides = [1, 1]} : vector<8x256xf32> to vector<8x64xf32>
    %153 = vector.extract_strided_slice %148 {offsets = [0, 192], sizes = [8, 64], strides = [1, 1]} : vector<8x256xf32> to vector<8x64xf32>
    %154 = arith.mulf %151, %138 : vector<8x64xf32>
    %155 = arith.mulf %150, %152 : vector<8x64xf32>
    %156 = arith.addf %154, %155 : vector<8x64xf32>
    %157 = math.tanh %156 : vector<8x64xf32>
    %158 = arith.mulf %153, %157 : vector<8x64xf32>
    %159 = vector.extract_strided_slice %8 {offsets = [56, 0], sizes = [8, 256], strides = [1, 1]} : vector<64x256xf32> to vector<8x256xf32>
    %cst_24 = arith.constant dense<0.000000e+00> : vector<8x256xf32>
    %160 = tpu.matmul %158, %9, %cst_24 {dimension_numbers = #tpu.dot_dimension_numbers<[1], [0], [0], [1], [0, 0, 1, 1], [], []>} : vector<8x64xf32>, vector<64x256xf32>, vector<8x256xf32> -> vector<8x256xf32>
    %161 = arith.addf %159, %160 : vector<8x256xf32>
    %162 = arith.negf %161 : vector<8x256xf32>
    %163 = math.exp %162 : vector<8x256xf32>
    %cst_25 = arith.constant 1.000000e+00 : f32
    %164 = vector.broadcast %cst_25 : f32 to vector<8x256xf32>
    %165 = arith.addf %164, %163 : vector<8x256xf32>
    %166 = arith.divf %164, %165 : vector<8x256xf32>
    %167 = math.tanh %161 : vector<8x256xf32>
    %168 = vector.extract_strided_slice %166 {offsets = [0, 0], sizes = [8, 64], strides = [1, 1]} : vector<8x256xf32> to vector<8x64xf32>
    %169 = vector.extract_strided_slice %166 {offsets = [0, 64], sizes = [8, 64], strides = [1, 1]} : vector<8x256xf32> to vector<8x64xf32>
    %170 = vector.extract_strided_slice %167 {offsets = [0, 128], sizes = [8, 64], strides = [1, 1]} : vector<8x256xf32> to vector<8x64xf32>
    %171 = vector.extract_strided_slice %166 {offsets = [0, 192], sizes = [8, 64], strides = [1, 1]} : vector<8x256xf32> to vector<8x64xf32>
    %172 = arith.mulf %169, %156 : vector<8x64xf32>
    %173 = arith.mulf %168, %170 : vector<8x64xf32>
    %174 = arith.addf %172, %173 : vector<8x64xf32>
    %175 = math.tanh %174 : vector<8x64xf32>
    %176 = arith.mulf %171, %175 : vector<8x64xf32>
    %177 = arith.select %12, %156, %174 : vector<8x64xi1>, vector<8x64xf32>
    %178 = arith.select %12, %158, %176 : vector<8x64xi1>, vector<8x64xf32>
    %179 = tpu.concatenate %178, %177 in 1 : vector<8x64xf32>, vector<8x64xf32> -> vector<8x128xf32>
    %c0_26 = arith.constant 0 : index
    %c0_27 = arith.constant 0 : index
    %180 = vector.load %arg4[%c0_26, %c0_27] : memref<8x128xf32, #tpu.memory_space<vmem>>, vector<8x128xf32>
    tpu.vector_store %arg4[%c0_26, %c0_27], %179 {strides = array<i32>} : memref<8x128xf32, #tpu.memory_space<vmem>>, vector<8x128xf32>,
    return
  }
  func.func @transform_0(%arg0: i32) -> (i32, i32) {
    %c0_i32 = arith.constant 0 : i32
    %c0_i32_0 = arith.constant 0 : i32
    %c0_i32_1 = arith.constant 0 : i32
    return %c0_i32, %c0_i32_0 : i32, i32
  }
  func.func @transform_1(%arg0: i32) -> (i32, i32) {
    %c0_i32 = arith.constant 0 : i32
    %c0_i32_0 = arith.constant 0 : i32
    %c0_i32_1 = arith.constant 0 : i32
    return %c0_i32, %c0_i32_0 : i32, i32
  }
  func.func @transform_2(%arg0: i32) -> (i32, i32) {
    %c0_i32 = arith.constant 0 : i32
    %c0_i32_0 = arith.constant 0 : i32
    %c0_i32_1 = arith.constant 0 : i32
    return %c0_i32, %c0_i32_0 : i32, i32
  }
  func.func @transform_3(%arg0: i32) -> (i32, i32) {
    %c0_i32 = arith.constant 0 : i32
    %c0_i32_0 = arith.constant 0 : i32
    %c0_i32_1 = arith.constant 0 : i32
    return %c0_i32, %c0_i32_0 : i32, i32
  }
}

</mosaic_0001>

<llo_original>
// kernel: encoder_forward.1
$region0: #{encoder_forward.1}
  #allocation0 [shape = 'u32[]', space=smem, size = 0x4, offset = 0x4, fixed_abs, tag = 'smem constant byte address 0x4 - core index']
  #allocation1 [shape = 'u32[72,128]{1,0:T(1,128)}', space=vmem, size = 0x9000, scoped, tag = 'internal scratch']
  %s0 = inlined_call_operand.vmem [shape: s32[64,1], index: 0, kind: input, shape index: {}]
  %s1 = inlined_call_operand.hbm [shape: f32[56,256], index: 1, kind: input, shape index: {}]
  %s2 = inlined_call_operand.hbm [shape: f32[64,256], index: 2, kind: input, shape index: {}]
  %s3 = inlined_call_operand.vmem [shape: f32[8,128], index: 3, kind: output, shape index: {}]
  %s4 = sld [smem:[#allocation0]]
  $region30: #{encoder_forward.1} parent=0
    _
  %s6 = ssub.s32 1, %s4
  %s7 = scalar_select 0, %s6, %s4
  $region1: #{encoder_forward.1} parent=0
    #allocation2 [shape = 'u8[57344]{0}', space=vmem, size = 0xe000, scoped, tag = 'input window, operand 1, single buffered']
    #allocation3 [shape = 's32[1]{0}', space=sflag, size = 0x4, scoped, tag = 'scoped memory for encoder_forward.1']
    #allocation4 [shape = 'u8[65536]{0}', space=vmem, size = 0x10000, scoped, tag = 'input window, operand 2, single buffered']
    #allocation5 [shape = 's32[1]{0}', space=sflag, size = 0x4, scoped, tag = 'scoped memory for encoder_forward.1']
    %8 = vsyncpa [#allocation3], 0
    %9 = vsyncpa [#allocation5], 0
    // Predicated region
    $region2: #{encoder_forward.1} parent=1 // pred_check
      _
    $region3: #{encoder_forward.1} parent=1 // pred_check_branch
      %11 = sbr.rel (0) target = $region5
    $region4: #{encoder_forward.1} parent=1 // pred_region
      _
    $region5: #{encoder_forward.1} parent=1 // pred_fallthru
      _
    // Predicated region
    $region6: #{encoder_forward.1} parent=1 // pred_check
      _
    $region7: #{encoder_forward.1} parent=1 // pred_check_branch
      %13 = sbr.rel (0) target = $region9
    $region8: #{encoder_forward.1} parent=1 // pred_region
      %15 = vsyncadd [#allocation3], 0
      %s16 = sshll.u32 %s1, 4
      %s17 = int_to_ptr.hbm [resolvable:$true] %s16
      %s18 = sshll.u32 [#allocation2], 4
      %s19 = int_to_ptr.vmem [resolvable:$true] %s18
      %24 = dma.hbm_to_vmem [thread:$0]  %s17, 1792, %s19, [#allocation3], 256, 256, 16
    $region9: #{encoder_forward.1} parent=1 // pred_fallthru
      _
    // Predicated region
    $region10: #{encoder_forward.1} parent=1 // pred_check
      _
    $region11: #{encoder_forward.1} parent=1 // pred_check_branch
      %26 = sbr.rel (0) target = $region13
    $region12: #{encoder_forward.1} parent=1 // pred_region
      %28 = vsyncadd [#allocation5], 0
      %s29 = sshll.u32 %s2, 4
      %s30 = int_to_ptr.hbm [resolvable:$true] %s29
      %s31 = sshll.u32 [#allocation4], 4
      %s32 = int_to_ptr.vmem [resolvable:$true] %s31
      %37 = dma.hbm_to_vmem [thread:$0]  %s30, 2048, %s32, [#allocation5], 256, 256, 16
    $region13: #{encoder_forward.1} parent=1 // pred_fallthru
      _
    // Predicated region
    $region14: #{encoder_forward.1} parent=1 // pred_check
      _
    $region15: #{encoder_forward.1} parent=1 // pred_check_branch
      %39 = sbr.rel (0) target = $region17
    $region16: #{encoder_forward.1} parent=1 // pred_region
      %41 = dma.done [#allocation3], 1792
    $region17: #{encoder_forward.1} parent=1 // pred_fallthru
      _
    // Predicated region
    $region18: #{encoder_forward.1} parent=1 // pred_check
      _
    $region19: #{encoder_forward.1} parent=1 // pred_check_branch
      %43 = sbr.rel (0) target = $region21
    $region20: #{encoder_forward.1} parent=1 // pred_region
      %45 = dma.done [#allocation5], 2048
    $region21: #{encoder_forward.1} parent=1 // pred_fallthru
      _
    %v46 = vld [vmem:[%s0] sm:$0xff]
    %v47 = vld [vmem:[%s0 + $0x8] sm:$0xff]
    %v48 = vld [vmem:[%s0 + $0x10] sm:$0xff]
    %v49 = vld [vmem:[%s0 + $0x18] sm:$0xff]
    %v50 = vld [vmem:[%s0 + $0x20] sm:$0xff]
    %v51 = vld [vmem:[%s0 + $0x28] sm:$0xff]
    %v52 = vld [vmem:[%s0 + $0x30] sm:$0xff]
    %v53 = vld [vmem:[%s0 + $0x38] sm:$0xff]
    %v54 = vlaneseq
    %v55 = vand.u32 %v54, 127
    %56 = vset.pattern.permute.xlu0 0
    %57 = vperm.xlu0 %56, %v46
    %v58 = vpop.permute.xlu0 %57
    %59 = vset.pattern.permute.xlu0 0
    %60 = vperm.xlu0 %59, %v47
    %v61 = vpop.permute.xlu0 %60
    %62 = vset.pattern.permute.xlu0 0
    %63 = vperm.xlu0 %62, %v48
    %v64 = vpop.permute.xlu0 %63
    %65 = vset.pattern.permute.xlu0 0
    %66 = vperm.xlu0 %65, %v49
    %v67 = vpop.permute.xlu0 %66
    %68 = vset.pattern.permute.xlu0 0
    %69 = vperm.xlu0 %68, %v50
    %v70 = vpop.permute.xlu0 %69
    %71 = vset.pattern.permute.xlu0 0
    %72 = vperm.xlu0 %71, %v51
    %v73 = vpop.permute.xlu0 %72
    %74 = vset.pattern.permute.xlu0 0
    %75 = vperm.xlu0 %74, %v52
    %v76 = vpop.permute.xlu0 %75
    %77 = vset.pattern.permute.xlu0 0
    %78 = vperm.xlu0 %77, %v53
    %v79 = vpop.permute.xlu0 %78
    %vm80 = vcmp.eq.s32.totalorder %v55, %v58
    %vm81 = vcmp.eq.s32.totalorder %v55, %v61
    %vm82 = vcmp.eq.s32.totalorder %v55, %v64
    %vm83 = vcmp.eq.s32.totalorder %v55, %v67
    %vm84 = vcmp.eq.s32.totalorder %v55, %v70
    %vm85 = vcmp.eq.s32.totalorder %v55, %v73
    %vm86 = vcmp.eq.s32.totalorder %v55, %v76
    %vm87 = vcmp.eq.s32.totalorder %v55, %v79
    %v88 = vsel %vm80, 1.0, 0.0
    %v89 = vsel %vm81, 1.0, 0.0
    %v90 = vsel %vm82, 1.0, 0.0
    %v91 = vsel %vm83, 1.0, 0.0
    %v92 = vsel %vm84, 1.0, 0.0
    %v93 = vsel %vm85, 1.0, 0.0
    %v94 = vsel %vm86, 1.0, 0.0
    %v95 = vsel %vm87, 1.0, 0.0
    %v96 = vld [vmem:[#allocation2] sm:$0xff]
    %v97 = vld [vmem:[#allocation2 + $0x8] sm:$0xff]
    %v98 = vld [vmem:[#allocation2 + $0x10] sm:$0xff]
    %v99 = vld [vmem:[#allocation2 + $0x18] sm:$0xff]
    %v100 = vld [vmem:[#allocation2 + $0x20] sm:$0xff]
    %v101 = vld [vmem:[#allocation2 + $0x28] sm:$0xff]
    %v102 = vld [vmem:[#allocation2 + $0x30] sm:$0xff]
    %v103 = vld [vmem:[#allocation2 + $0x38] sm:$0xff]
    %v104 = vld [vmem:[#allocation2 + $0x40] sm:$0xff]
    %v105 = vld [vmem:[#allocation2 + $0x48] sm:$0xff]
    %v106 = vld [vmem:[#allocation2 + $0x50] sm:$0xff]
    %v107 = vld [vmem:[#allocation2 + $0x58] sm:$0xff]
    %v108 = vld [vmem:[#allocation2 + $0x60] sm:$0xff]
    %v109 = vld [vmem:[#allocation2 + $0x68] sm:$0xff]
    %vm110 = vcmask 457728
    %v112 = vsel %vm110, %v88, 0
    %v115 = vsel %vm110, %v89, 0
    %v118 = vsel %vm110, %v90, 0
    %v121 = vsel %vm110, %v91, 0
    %v124 = vsel %vm110, %v92, 0
    %v127 = vsel %vm110, %v93, 0
    %v130 = vsel %vm110, %v94, 0
    %v133 = vsel %vm110, %v95, 0
    %135 = vmatpush.msra.mxu0 0.0
    %136 = vmatpush.msra.mxu0 0.0
    %137 = vmatpush.msra.mxu0 0.0
    %138 = vmatpush.msra.mxu0 0.0
    %139 = vmatpush.msra.mxu0 0.0
    %140 = vmatpush.msra.mxu0 0.0
    %141 = vmatpush.msra.mxu0 0.0
    %142 = vmatpush.msra.mxu0 0.0
    %143 = vmatpush.msra.mxu0 0.0
    %144 = vmatpush.msra.mxu0 %v108
    %145 = vmatpush.msra.mxu0 %v106
    %146 = vmatpush.msra.mxu0 %v104
    %147 = vmatpush.msra.mxu0 %v102
    %148 = vmatpush.msra.mxu0 %v100
    %149 = vmatpush.msra.mxu0 %v98
    %150 = vmatpush.msra.mxu0 %v96
    %151 = vmatmul.f32.gmra.mxu0 %v112
    %v152 = vpop.f32.mrf.mxu0
    %v153 = vadd.f32 0.0, %v152
    %154 = vmatmul.f32.gmra.mxu0 %v115
    %v155 = vpop.f32.mrf.mxu0
    %v156 = vadd.f32 0.0, %v155
    %157 = vmatmul.f32.gmra.mxu0 %v118
    %v158 = vpop.f32.mrf.mxu0
    %v159 = vadd.f32 0.0, %v158
    %160 = vmatmul.f32.gmra.mxu0 %v121
    %v161 = vpop.f32.mrf.mxu0
    %v162 = vadd.f32 0.0, %v161
    %163 = vmatmul.f32.gmra.mxu0 %v124
    %v164 = vpop.f32.mrf.mxu0
    %v165 = vadd.f32 0.0, %v164
    %166 = vmatmul.f32.gmra.mxu0 %v127
    %v167 = vpop.f32.mrf.mxu0
    %v168 = vadd.f32 0.0, %v167
    %169 = vmatmul.f32.gmra.mxu0 %v130
    %v170 = vpop.f32.mrf.mxu0
    %v171 = vadd.f32 0.0, %v170
    %172 = vmatmul.f32.gmra.mxu0 %v133
    %v173 = vpop.f32.mrf.mxu0
    %v174 = vadd.f32 0.0, %v173
    %175 = vdwg.mxu0
    %176 = vmatpush.msra.mxu0 0.0
    %177 = vmatpush.msra.mxu0 0.0
    %178 = vmatpush.msra.mxu0 0.0
    %179 = vmatpush.msra.mxu0 0.0
    %180 = vmatpush.msra.mxu0 0.0
    %181 = vmatpush.msra.mxu0 0.0
    %182 = vmatpush.msra.mxu0 0.0
    %183 = vmatpush.msra.mxu0 0.0
    %184 = vmatpush.msra.mxu0 0.0
    %185 = vmatpush.msra.mxu0 %v109
    %186 = vmatpush.msra.mxu0 %v107
    %187 = vmatpush.msra.mxu0 %v105
    %188 = vmatpush.msra.mxu0 %v103
    %189 = vmatpush.msra.mxu0 %v101
    %190 = vmatpush.msra.mxu0 %v99
    %191 = vmatpush.msra.mxu0 %v97
    %192 = vmatmul.f32.gmra.mxu0 %v112
    %v193 = vpop.f32.mrf.mxu0
    %v194 = vadd.f32 0.0, %v193
    %195 = vmatmul.f32.gmra.mxu0 %v115
    %v196 = vpop.f32.mrf.mxu0
    %v197 = vadd.f32 0.0, %v196
    %198 = vmatmul.f32.gmra.mxu0 %v118
    %v199 = vpop.f32.mrf.mxu0
    %v200 = vadd.f32 0.0, %v199
    %201 = vmatmul.f32.gmra.mxu0 %v121
    %v202 = vpop.f32.mrf.mxu0
    %v203 = vadd.f32 0.0, %v202
    %204 = vmatmul.f32.gmra.mxu0 %v124
    %v205 = vpop.f32.mrf.mxu0
    %v206 = vadd.f32 0.0, %v205
    %207 = vmatmul.f32.gmra.mxu0 %v127
    %v208 = vpop.f32.mrf.mxu0
    %v209 = vadd.f32 0.0, %v208
    %210 = vmatmul.f32.gmra.mxu0 %v130
    %v211 = vpop.f32.mrf.mxu0
    %v212 = vadd.f32 0.0, %v211
    %213 = vmatmul.f32.gmra.mxu0 %v133
    %v214 = vpop.f32.mrf.mxu0
    %v215 = vadd.f32 0.0, %v214
    %216 = vdwg.mxu0
    %v217 = vld [vmem:[#allocation4] sm:$0xff]
    %v218 = vld [vmem:[#allocation4 + $0x8] sm:$0xff]
    %v219 = vld [vmem:[#allocation4 + $0x10] sm:$0xff]
    %v220 = vld [vmem:[#allocation4 + $0x18] sm:$0xff]
    %v221 = vld [vmem:[#allocation4 + $0x20] sm:$0xff]
    %v222 = vld [vmem:[#allocation4 + $0x28] sm:$0xff]
    %v223 = vld [vmem:[#allocation4 + $0x30] sm:$0xff]
    %v224 = vld [vmem:[#allocation4 + $0x38] sm:$0xff]
    %v225 = vld [vmem:[#allocation4 + $0x40] sm:$0xff]
    %v226 = vld [vmem:[#allocation4 + $0x48] sm:$0xff]
    %v227 = vld [vmem:[#allocation4 + $0x50] sm:$0xff]
    %v228 = vld [vmem:[#allocation4 + $0x58] sm:$0xff]
    %v229 = vld [vmem:[#allocation4 + $0x60] sm:$0xff]
    %v230 = vld [vmem:[#allocation4 + $0x68] sm:$0xff]
    %v231 = vld [vmem:[#allocation4 + $0x70] sm:$0xff]
    %v232 = vld [vmem:[#allocation4 + $0x78] sm:$0xff]
    %vm233 = vcmp.lt.s32.totalorder %v55, 32
    %v234 = vxor.u32 %v153, 2147483648
    %v235 = vxor.u32 %v194, 2147483648
    %v236 = vmul.f32 %v234, 1.442695
    %v237 = vpow.pop %v236
    %v238 = vmul.f32 %v235, 1.442695
    %v239 = vpow.pop %v238
    %v240 = vadd.f32 %v237, 1.0
    %v241 = vadd.f32 %v239, 1.0
    %v242 = vrcp.pop %v240
    %v243 = vmul.f32 %v240, %v242
    %v244 = vsub.f32 1.0, %v243
    %v245 = vmul.f32 %v242, %v244
    %v246 = vadd.f32 %v242, %v245
    %vm247 = vweird.f32 %v240
    %vm248 = vweird.f32 %v242
    %vm249 = vmor %vm247, %vm248
    %v250 = vsel %vm249, %v242, %v246
    %v251 = vand.u32 2147483647, %v240
    %vm252 = vcmp.eq.f32.partialorder %v251, 8.507059e+37
    %v253 = vand.u32 %v240, 2147483648
    %v254 = vor.u32 1.1754944e-38, %v253
    %v255 = vsel %vm252, %v254, %v250
    %v256 = vmul.f32 1.0, %v255
    %v257 = vrcp.pop %v241
    %v258 = vmul.f32 %v241, %v257
    %v259 = vsub.f32 1.0, %v258
    %v260 = vmul.f32 %v257, %v259
    %v261 = vadd.f32 %v257, %v260
    %vm262 = vweird.f32 %v241
    %vm263 = vweird.f32 %v257
    %vm264 = vmor %vm262, %vm263
    %v265 = vsel %vm264, %v257, %v261
    %v266 = vand.u32 2147483647, %v241
    %vm267 = vcmp.eq.f32.partialorder %v266, 8.507059e+37
    %v268 = vand.u32 %v241, 2147483648
    %v269 = vor.u32 1.1754944e-38, %v268
    %v270 = vsel %vm267, %v269, %v265
    %v271 = vmul.f32 1.0, %v270
    %v272 = vtanh.pop %v194
    %v273 = vmul.f32 %v256, 0.0
    %v274 = vmul.f32 %v256, %v272
    %276 = vrot.lane.b32.xlu0 %v274, 64
    %v277 = vpop.permute.xlu0 %276
    %v279 = vadd.f32 %v273, %v277
    %v280 = vtanh.pop %v279
    %v281 = vmul.f32 %v271, %v280
    %283 = vrot.lane.b32.xlu0 %v279, 64
    %v284 = vpop.permute.xlu0 %283
    %v286 = vsel %vm233, %v284, 0.0
    %288 = vrot.lane.b32.xlu0 %v281, 64
    %v289 = vpop.permute.xlu0 %288
    %v291 = vsel %vm233, %v289, 0.0
    %vm292 = vcmask 523264
    %v294 = vsel %vm292, %v291, 0
    %296 = vmatpush.msra.mxu0 0.0
    %297 = vmatpush.msra.mxu0 0.0
    %298 = vmatpush.msra.mxu0 0.0
    %299 = vmatpush.msra.mxu0 0.0
    %300 = vmatpush.msra.mxu0 0.0
    %301 = vmatpush.msra.mxu0 0.0
    %302 = vmatpush.msra.mxu0 0.0
    %303 = vmatpush.msra.mxu0 0.0
    %304 = vmatpush.msra.mxu0 %v231
    %305 = vmatpush.msra.mxu0 %v229
    %306 = vmatpush.msra.mxu0 %v227
    %307 = vmatpush.msra.mxu0 %v225
    %308 = vmatpush.msra.mxu0 %v223
    %309 = vmatpush.msra.mxu0 %v221
    %310 = vmatpush.msra.mxu0 %v219
    %311 = vmatpush.msra.mxu0 %v217
    %312 = vmatmul.f32.gmra.mxu0 %v294
    %v313 = vpop.f32.mrf.mxu0
    %v314 = vadd.f32 0.0, %v313
    %315 = vdwg.mxu0
    %316 = vmatpush.msra.mxu0 0.0
    %317 = vmatpush.msra.mxu0 0.0
    %318 = vmatpush.msra.mxu0 0.0
    %319 = vmatpush.msra.mxu0 0.0
    %320 = vmatpush.msra.mxu0 0.0
    %321 = vmatpush.msra.mxu0 0.0
    %322 = vmatpush.msra.mxu0 0.0
    %323 = vmatpush.msra.mxu0 0.0
    %324 = vmatpush.msra.mxu0 %v232
    %325 = vmatpush.msra.mxu0 %v230
    %326 = vmatpush.msra.mxu0 %v228
    %327 = vmatpush.msra.mxu0 %v226
    %328 = vmatpush.msra.mxu0 %v224
    %329 = vmatpush.msra.mxu0 %v222
    %330 = vmatpush.msra.mxu0 %v220
    %331 = vmatpush.msra.mxu0 %v218
    %332 = vmatmul.f32.gmra.mxu0 %v294
    %v333 = vpop.f32.mrf.mxu0
    %v334 = vadd.f32 0.0, %v333
    %335 = vdwg.mxu0
    %v336 = vadd.f32 %v156, %v314
    %v337 = vadd.f32 %v197, %v334
    %v338 = vxor.u32 %v336, 2147483648
    %v339 = vxor.u32 %v337, 2147483648
    %v340 = vmul.f32 %v338, 1.442695
    %v341 = vpow.pop %v340
    %v342 = vmul.f32 %v339, 1.442695
    %v343 = vpow.pop %v342
    %v344 = vadd.f32 %v341, 1.0
    %v345 = vadd.f32 %v343, 1.0
    %v346 = vrcp.pop %v344
    %v347 = vmul.f32 %v344, %v346
    %v348 = vsub.f32 1.0, %v347
    %v349 = vmul.f32 %v346, %v348
    %v350 = vadd.f32 %v346, %v349
    %vm351 = vweird.f32 %v344
    %vm352 = vweird.f32 %v346
    %vm353 = vmor %vm351, %vm352
    %v354 = vsel %vm353, %v346, %v350
    %v355 = vand.u32 2147483647, %v344
    %vm356 = vcmp.eq.f32.partialorder %v355, 8.507059e+37
    %v357 = vand.u32 %v344, 2147483648
    %v358 = vor.u32 1.1754944e-38, %v357
    %v359 = vsel %vm356, %v358, %v354
    %v360 = vmul.f32 1.0, %v359
    %v361 = vrcp.pop %v345
    %v362 = vmul.f32 %v345, %v361
    %v363 = vsub.f32 1.0, %v362
    %v364 = vmul.f32 %v361, %v363
    %v365 = vadd.f32 %v361, %v364
    %vm366 = vweird.f32 %v345
    %vm367 = vweird.f32 %v361
    %vm368 = vmor %vm366, %vm367
    %v369 = vsel %vm368, %v361, %v365
    %v370 = vand.u32 2147483647, %v345
    %vm371 = vcmp.eq.f32.partialorder %v370, 8.507059e+37
    %v372 = vand.u32 %v345, 2147483648
    %v373 = vor.u32 1.1754944e-38, %v372
    %v374 = vsel %vm371, %v373, %v369
    %v375 = vmul.f32 1.0, %v374
    %v376 = vtanh.pop %v337
    %378 = vrot.lane.b32.xlu0 %v286, 64
    %v379 = vpop.permute.xlu0 %378
    %v381 = vmul.f32 %v360, %v379
    %v382 = vmul.f32 %v360, %v376
    %384 = vrot.lane.b32.xlu0 %v382, 64
    %v385 = vpop.permute.xlu0 %384
    %v387 = vadd.f32 %v381, %v385
    %v388 = vtanh.pop %v387
    %v389 = vmul.f32 %v375, %v388
    %391 = vrot.lane.b32.xlu0 %v389, 64
    %v392 = vpop.permute.xlu0 %391
    %v393 = vsel %vm292, %v392, 0
    %395 = vmatpush.msra.mxu0 0.0
    %396 = vmatpush.msra.mxu0 0.0
    %397 = vmatpush.msra.mxu0 0.0
    %398 = vmatpush.msra.mxu0 0.0
    %399 = vmatpush.msra.mxu0 0.0
    %400 = vmatpush.msra.mxu0 0.0
    %401 = vmatpush.msra.mxu0 0.0
    %402 = vmatpush.msra.mxu0 0.0
    %403 = vmatpush.msra.mxu0 %v231
    %404 = vmatpush.msra.mxu0 %v229
    %405 = vmatpush.msra.mxu0 %v227
    %406 = vmatpush.msra.mxu0 %v225
    %407 = vmatpush.msra.mxu0 %v223
    %408 = vmatpush.msra.mxu0 %v221
    %409 = vmatpush.msra.mxu0 %v219
    %410 = vmatpush.msra.mxu0 %v217
    %411 = vmatmul.f32.gmra.mxu0 %v393
    %v412 = vpop.f32.mrf.mxu0
    %v413 = vadd.f32 0.0, %v412
    %414 = vdwg.mxu0
    %415 = vmatpush.msra.mxu0 0.0
    %416 = vmatpush.msra.mxu0 0.0
    %417 = vmatpush.msra.mxu0 0.0
    %418 = vmatpush.msra.mxu0 0.0
    %419 = vmatpush.msra.mxu0 0.0
    %420 = vmatpush.msra.mxu0 0.0
    %421 = vmatpush.msra.mxu0 0.0
    %422 = vmatpush.msra.mxu0 0.0
    %423 = vmatpush.msra.mxu0 %v232
    %424 = vmatpush.msra.mxu0 %v230
    %425 = vmatpush.msra.mxu0 %v228
    %426 = vmatpush.msra.mxu0 %v226
    %427 = vmatpush.msra.mxu0 %v224
    %428 = vmatpush.msra.mxu0 %v222
    %429 = vmatpush.msra.mxu0 %v220
    %430 = vmatpush.msra.mxu0 %v218
    %431 = vmatmul.f32.gmra.mxu0 %v393
    %v432 = vpop.f32.mrf.mxu0
    %v433 = vadd.f32 0.0, %v432
    %434 = vdwg.mxu0
    %v435 = vadd.f32 %v159, %v413
    %v436 = vadd.f32 %v200, %v433
    %v437 = vxor.u32 %v435, 2147483648
    %v438 = vxor.u32 %v436, 2147483648
    %v439 = vmul.f32 %v437, 1.442695
    %v440 = vpow.pop %v439
    %v441 = vmul.f32 %v438, 1.442695
    %v442 = vpow.pop %v441
    %v443 = vadd.f32 %v440, 1.0
    %v444 = vadd.f32 %v442, 1.0
    %v445 = vrcp.pop %v443
    %v446 = vmul.f32 %v443, %v445
    %v447 = vsub.f32 1.0, %v446
    %v448 = vmul.f32 %v445, %v447
    %v449 = vadd.f32 %v445, %v448
    %vm450 = vweird.f32 %v443
    %vm451 = vweird.f32 %v445
    %vm452 = vmor %vm450, %vm451
    %v453 = vsel %vm452, %v445, %v449
    %v454 = vand.u32 2147483647, %v443
    %vm455 = vcmp.eq.f32.partialorder %v454, 8.507059e+37
    %v456 = vand.u32 %v443, 2147483648
    %v457 = vor.u32 1.1754944e-38, %v456
    %v458 = vsel %vm455, %v457, %v453
    %v459 = vmul.f32 1.0, %v458
    %v460 = vrcp.pop %v444
    %v461 = vmul.f32 %v444, %v460
    %v462 = vsub.f32 1.0, %v461
    %v463 = vmul.f32 %v460, %v462
    %v464 = vadd.f32 %v460, %v463
    %vm465 = vweird.f32 %v444
    %vm466 = vweird.f32 %v460
    %vm467 = vmor %vm465, %vm466
    %v468 = vsel %vm467, %v460, %v464
    %v469 = vand.u32 2147483647, %v444
    %vm470 = vcmp.eq.f32.partialorder %v469, 8.507059e+37
    %v471 = vand.u32 %v444, 2147483648
    %v472 = vor.u32 1.1754944e-38, %v471
    %v473 = vsel %vm470, %v472, %v468
    %v474 = vmul.f32 1.0, %v473
    %v475 = vtanh.pop %v436
    %v476 = vmul.f32 %v459, %v387
    %v477 = vmul.f32 %v459, %v475
    %479 = vrot.lane.b32.xlu0 %v477, 64
    %v480 = vpop.permute.xlu0 %479
    %v482 = vadd.f32 %v476, %v480
    %v483 = vtanh.pop %v482
    %v484 = vmul.f32 %v474, %v483
    %486 = vrot.lane.b32.xlu0 %v484, 64
    %v487 = vpop.permute.xlu0 %486
    %v488 = vsel %vm292, %v487, 0
    %490 = vmatpush.msra.mxu0 0.0
    %491 = vmatpush.msra.mxu0 0.0
    %492 = vmatpush.msra.mxu0 0.0
    %493 = vmatpush.msra.mxu0 0.0
    %494 = vmatpush.msra.mxu0 0.0
    %495 = vmatpush.msra.mxu0 0.0
    %496 = vmatpush.msra.mxu0 0.0
    %497 = vmatpush.msra.mxu0 0.0
    %498 = vmatpush.msra.mxu0 %v231
    %499 = vmatpush.msra.mxu0 %v229
    %500 = vmatpush.msra.mxu0 %v227
    %501 = vmatpush.msra.mxu0 %v225
    %502 = vmatpush.msra.mxu0 %v223
    %503 = vmatpush.msra.mxu0 %v221
    %504 = vmatpush.msra.mxu0 %v219
    %505 = vmatpush.msra.mxu0 %v217
    %506 = vmatmul.f32.gmra.mxu0 %v488
    %v507 = vpop.f32.mrf.mxu0
    %v508 = vadd.f32 0.0, %v507
    %509 = vdwg.mxu0
    %510 = vmatpush.msra.mxu0 0.0
    %511 = vmatpush.msra.mxu0 0.0
    %512 = vmatpush.msra.mxu0 0.0
    %513 = vmatpush.msra.mxu0 0.0
    %514 = vmatpush.msra.mxu0 0.0
    %515 = vmatpush.msra.mxu0 0.0
    %516 = vmatpush.msra.mxu0 0.0
    %517 = vmatpush.msra.mxu0 0.0
    %518 = vmatpush.msra.mxu0 %v232
    %519 = vmatpush.msra.mxu0 %v230
    %520 = vmatpush.msra.mxu0 %v228
    %521 = vmatpush.msra.mxu0 %v226
    %522 = vmatpush.msra.mxu0 %v224
    %523 = vmatpush.msra.mxu0 %v222
    %524 = vmatpush.msra.mxu0 %v220
    %525 = vmatpush.msra.mxu0 %v218
    %526 = vmatmul.f32.gmra.mxu0 %v488
    %v527 = vpop.f32.mrf.mxu0
    %v528 = vadd.f32 0.0, %v527
    %529 = vdwg.mxu0
    %v530 = vadd.f32 %v162, %v508
    %v531 = vadd.f32 %v203, %v528
    %v532 = vxor.u32 %v530, 2147483648
    %v533 = vxor.u32 %v531, 2147483648
    %v534 = vmul.f32 %v532, 1.442695
    %v535 = vpow.pop %v534
    %v536 = vmul.f32 %v533, 1.442695
    %v537 = vpow.pop %v536
    %v538 = vadd.f32 %v535, 1.0
    %v539 = vadd.f32 %v537, 1.0
    %v540 = vrcp.pop %v538
    %v541 = vmul.f32 %v538, %v540
    %v542 = vsub.f32 1.0, %v541
    %v543 = vmul.f32 %v540, %v542
    %v544 = vadd.f32 %v540, %v543
    %vm545 = vweird.f32 %v538
    %vm546 = vweird.f32 %v540
    %vm547 = vmor %vm545, %vm546
    %v548 = vsel %vm547, %v540, %v544
    %v549 = vand.u32 2147483647, %v538
    %vm550 = vcmp.eq.f32.partialorder %v549, 8.507059e+37
    %v551 = vand.u32 %v538, 2147483648
    %v552 = vor.u32 1.1754944e-38, %v551
    %v553 = vsel %vm550, %v552, %v548
    %v554 = vmul.f32 1.0, %v553
    %v555 = vrcp.pop %v539
    %v556 = vmul.f32 %v539, %v555
    %v557 = vsub.f32 1.0, %v556
    %v558 = vmul.f32 %v555, %v557
    %v559 = vadd.f32 %v555, %v558
    %vm560 = vweird.f32 %v539
    %vm561 = vweird.f32 %v555
    %vm562 = vmor %vm560, %vm561
    %v563 = vsel %vm562, %v555, %v559
    %v564 = vand.u32 2147483647, %v539
    %vm565 = vcmp.eq.f32.partialorder %v564, 8.507059e+37
    %v566 = vand.u32 %v539, 2147483648
    %v567 = vor.u32 1.1754944e-38, %v566
    %v568 = vsel %vm565, %v567, %v563
    %v569 = vmul.f32 1.0, %v568
    %v570 = vtanh.pop %v531
    %v571 = vmul.f32 %v554, %v482
    %v572 = vmul.f32 %v554, %v570
    %574 = vrot.lane.b32.xlu0 %v572, 64
    %v575 = vpop.permute.xlu0 %574
    %v577 = vadd.f32 %v571, %v575
    %v578 = vtanh.pop %v577
    %v579 = vmul.f32 %v569, %v578
    %581 = vrot.lane.b32.xlu0 %v579, 64
    %v582 = vpop.permute.xlu0 %581
    %v583 = vsel %vm292, %v582, 0
    %585 = vmatpush.msra.mxu0 0.0
    %586 = vmatpush.msra.mxu0 0.0
    %587 = vmatpush.msra.mxu0 0.0
    %588 = vmatpush.msra.mxu0 0.0
    %589 = vmatpush.msra.mxu0 0.0
    %590 = vmatpush.msra.mxu0 0.0
    %591 = vmatpush.msra.mxu0 0.0
    %592 = vmatpush.msra.mxu0 0.0
    %593 = vmatpush.msra.mxu0 %v231
    %594 = vmatpush.msra.mxu0 %v229
    %595 = vmatpush.msra.mxu0 %v227
    %596 = vmatpush.msra.mxu0 %v225
    %597 = vmatpush.msra.mxu0 %v223
    %598 = vmatpush.msra.mxu0 %v221
    %599 = vmatpush.msra.mxu0 %v219
    %600 = vmatpush.msra.mxu0 %v217
    %601 = vmatmul.f32.gmra.mxu0 %v583
    %v602 = vpop.f32.mrf.mxu0
    %v603 = vadd.f32 0.0, %v602
    %604 = vdwg.mxu0
    %605 = vmatpush.msra.mxu0 0.0
    %606 = vmatpush.msra.mxu0 0.0
    %607 = vmatpush.msra.mxu0 0.0
    %608 = vmatpush.msra.mxu0 0.0
    %609 = vmatpush.msra.mxu0 0.0
    %610 = vmatpush.msra.mxu0 0.0
    %611 = vmatpush.msra.mxu0 0.0
    %612 = vmatpush.msra.mxu0 0.0
    %613 = vmatpush.msra.mxu0 %v232
    %614 = vmatpush.msra.mxu0 %v230
    %615 = vmatpush.msra.mxu0 %v228
    %616 = vmatpush.msra.mxu0 %v226
    %617 = vmatpush.msra.mxu0 %v224
    %618 = vmatpush.msra.mxu0 %v222
    %619 = vmatpush.msra.mxu0 %v220
    %620 = vmatpush.msra.mxu0 %v218
    %621 = vmatmul.f32.gmra.mxu0 %v583
    %v622 = vpop.f32.mrf.mxu0
    %v623 = vadd.f32 0.0, %v622
    %624 = vdwg.mxu0
    %v625 = vadd.f32 %v165, %v603
    %v626 = vadd.f32 %v206, %v623
    %v627 = vxor.u32 %v625, 2147483648
    %v628 = vxor.u32 %v626, 2147483648
    %v629 = vmul.f32 %v627, 1.442695
    %v630 = vpow.pop %v629
    %v631 = vmul.f32 %v628, 1.442695
    %v632 = vpow.pop %v631
    %v633 = vadd.f32 %v630, 1.0
    %v634 = vadd.f32 %v632, 1.0
    %v635 = vrcp.pop %v633
    %v636 = vmul.f32 %v633, %v635
    %v637 = vsub.f32 1.0, %v636
    %v638 = vmul.f32 %v635, %v637
    %v639 = vadd.f32 %v635, %v638
    %vm640 = vweird.f32 %v633
    %vm641 = vweird.f32 %v635
    %vm642 = vmor %vm640, %vm641
    %v643 = vsel %vm642, %v635, %v639
    %v644 = vand.u32 2147483647, %v633
    %vm645 = vcmp.eq.f32.partialorder %v644, 8.507059e+37
    %v646 = vand.u32 %v633, 2147483648
    %v647 = vor.u32 1.1754944e-38, %v646
    %v648 = vsel %vm645, %v647, %v643
    %v649 = vmul.f32 1.0, %v648
    %v650 = vrcp.pop %v634
    %v651 = vmul.f32 %v634, %v650
    %v652 = vsub.f32 1.0, %v651
    %v653 = vmul.f32 %v650, %v652
    %v654 = vadd.f32 %v650, %v653
    %vm655 = vweird.f32 %v634
    %vm656 = vweird.f32 %v650
    %vm657 = vmor %vm655, %vm656
    %v658 = vsel %vm657, %v650, %v654
    %v659 = vand.u32 2147483647, %v634
    %vm660 = vcmp.eq.f32.partialorder %v659, 8.507059e+37
    %v661 = vand.u32 %v634, 2147483648
    %v662 = vor.u32 1.1754944e-38, %v661
    %v663 = vsel %vm660, %v662, %v658
    %v664 = vmul.f32 1.0, %v663
    %v665 = vtanh.pop %v626
    %v666 = vmul.f32 %v649, %v577
    %v667 = vmul.f32 %v649, %v665
    %669 = vrot.lane.b32.xlu0 %v667, 64
    %v670 = vpop.permute.xlu0 %669
    %v672 = vadd.f32 %v666, %v670
    %v673 = vtanh.pop %v672
    %v674 = vmul.f32 %v664, %v673
    %676 = vrot.lane.b32.xlu0 %v674, 64
    %v677 = vpop.permute.xlu0 %676
    %v678 = vsel %vm292, %v677, 0
    %680 = vmatpush.msra.mxu0 0.0
    %681 = vmatpush.msra.mxu0 0.0
    %682 = vmatpush.msra.mxu0 0.0
    %683 = vmatpush.msra.mxu0 0.0
    %684 = vmatpush.msra.mxu0 0.0
    %685 = vmatpush.msra.mxu0 0.0
    %686 = vmatpush.msra.mxu0 0.0
    %687 = vmatpush.msra.mxu0 0.0
    %688 = vmatpush.msra.mxu0 %v231
    %689 = vmatpush.msra.mxu0 %v229
    %690 = vmatpush.msra.mxu0 %v227
    %691 = vmatpush.msra.mxu0 %v225
    %692 = vmatpush.msra.mxu0 %v223
    %693 = vmatpush.msra.mxu0 %v221
    %694 = vmatpush.msra.mxu0 %v219
    %695 = vmatpush.msra.mxu0 %v217
    %696 = vmatmul.f32.gmra.mxu0 %v678
    %v697 = vpop.f32.mrf.mxu0
    %v698 = vadd.f32 0.0, %v697
    %699 = vdwg.mxu0
    %700 = vmatpush.msra.mxu0 0.0
    %701 = vmatpush.msra.mxu0 0.0
    %702 = vmatpush.msra.mxu0 0.0
    %703 = vmatpush.msra.mxu0 0.0
    %704 = vmatpush.msra.mxu0 0.0
    %705 = vmatpush.msra.mxu0 0.0
    %706 = vmatpush.msra.mxu0 0.0
    %707 = vmatpush.msra.mxu0 0.0
    %708 = vmatpush.msra.mxu0 %v232
    %709 = vmatpush.msra.mxu0 %v230
    %710 = vmatpush.msra.mxu0 %v228
    %711 = vmatpush.msra.mxu0 %v226
    %712 = vmatpush.msra.mxu0 %v224
    %713 = vmatpush.msra.mxu0 %v222
    %714 = vmatpush.msra.mxu0 %v220
    %715 = vmatpush.msra.mxu0 %v218
    %716 = vmatmul.f32.gmra.mxu0 %v678
    %v717 = vpop.f32.mrf.mxu0
    %v718 = vadd.f32 0.0, %v717
    %719 = vdwg.mxu0
    %v720 = vadd.f32 %v168, %v698
    %v721 = vadd.f32 %v209, %v718
    %v722 = vxor.u32 %v720, 2147483648
    %v723 = vxor.u32 %v721, 2147483648
    %v724 = vmul.f32 %v722, 1.442695
    %v725 = vpow.pop %v724
    %v726 = vmul.f32 %v723, 1.442695
    %v727 = vpow.pop %v726
    %v728 = vadd.f32 %v725, 1.0
    %v729 = vadd.f32 %v727, 1.0
    %v730 = vrcp.pop %v728
    %v731 = vmul.f32 %v728, %v730
    %v732 = vsub.f32 1.0, %v731
    %v733 = vmul.f32 %v730, %v732
    %v734 = vadd.f32 %v730, %v733
    %vm735 = vweird.f32 %v728
    %vm736 = vweird.f32 %v730
    %vm737 = vmor %vm735, %vm736
    %v738 = vsel %vm737, %v730, %v734
    %v739 = vand.u32 2147483647, %v728
    %vm740 = vcmp.eq.f32.partialorder %v739, 8.507059e+37
    %v741 = vand.u32 %v728, 2147483648
    %v742 = vor.u32 1.1754944e-38, %v741
    %v743 = vsel %vm740, %v742, %v738
    %v744 = vmul.f32 1.0, %v743
    %v745 = vrcp.pop %v729
    %v746 = vmul.f32 %v729, %v745
    %v747 = vsub.f32 1.0, %v746
    %v748 = vmul.f32 %v745, %v747
    %v749 = vadd.f32 %v745, %v748
    %vm750 = vweird.f32 %v729
    %vm751 = vweird.f32 %v745
    %vm752 = vmor %vm750, %vm751
    %v753 = vsel %vm752, %v745, %v749
    %v754 = vand.u32 2147483647, %v729
    %vm755 = vcmp.eq.f32.partialorder %v754, 8.507059e+37
    %v756 = vand.u32 %v729, 2147483648
    %v757 = vor.u32 1.1754944e-38, %v756
    %v758 = vsel %vm755, %v757, %v753
    %v759 = vmul.f32 1.0, %v758
    %v760 = vtanh.pop %v721
    %v761 = vmul.f32 %v744, %v672
    %v762 = vmul.f32 %v744, %v760
    %764 = vrot.lane.b32.xlu0 %v762, 64
    %v765 = vpop.permute.xlu0 %764
    %v767 = vadd.f32 %v761, %v765
    %v768 = vtanh.pop %v767
    %v769 = vmul.f32 %v759, %v768
    %771 = vrot.lane.b32.xlu0 %v769, 64
    %v772 = vpop.permute.xlu0 %771
    %v773 = vsel %vm292, %v772, 0
    %775 = vmatpush.msra.mxu0 0.0
    %776 = vmatpush.msra.mxu0 0.0
    %777 = vmatpush.msra.mxu0 0.0
    %778 = vmatpush.msra.mxu0 0.0
    %779 = vmatpush.msra.mxu0 0.0
    %780 = vmatpush.msra.mxu0 0.0
    %781 = vmatpush.msra.mxu0 0.0
    %782 = vmatpush.msra.mxu0 0.0
    %783 = vmatpush.msra.mxu0 %v231
    %784 = vmatpush.msra.mxu0 %v229
    %785 = vmatpush.msra.mxu0 %v227
    %786 = vmatpush.msra.mxu0 %v225
    %787 = vmatpush.msra.mxu0 %v223
    %788 = vmatpush.msra.mxu0 %v221
    %789 = vmatpush.msra.mxu0 %v219
    %790 = vmatpush.msra.mxu0 %v217
    %791 = vmatmul.f32.gmra.mxu0 %v773
    %v792 = vpop.f32.mrf.mxu0
    %v793 = vadd.f32 0.0, %v792
    %794 = vdwg.mxu0
    %795 = vmatpush.msra.mxu0 0.0
    %796 = vmatpush.msra.mxu0 0.0
    %797 = vmatpush.msra.mxu0 0.0
    %798 = vmatpush.msra.mxu0 0.0
    %799 = vmatpush.msra.mxu0 0.0
    %800 = vmatpush.msra.mxu0 0.0
    %801 = vmatpush.msra.mxu0 0.0
    %802 = vmatpush.msra.mxu0 0.0
    %803 = vmatpush.msra.mxu0 %v232
    %804 = vmatpush.msra.mxu0 %v230
    %805 = vmatpush.msra.mxu0 %v228
    %806 = vmatpush.msra.mxu0 %v226
    %807 = vmatpush.msra.mxu0 %v224
    %808 = vmatpush.msra.mxu0 %v222
    %809 = vmatpush.msra.mxu0 %v220
    %810 = vmatpush.msra.mxu0 %v218
    %811 = vmatmul.f32.gmra.mxu0 %v773
    %v812 = vpop.f32.mrf.mxu0
    %v813 = vadd.f32 0.0, %v812
    %814 = vdwg.mxu0
    %v815 = vadd.f32 %v171, %v793
    %v816 = vadd.f32 %v212, %v813
    %v817 = vxor.u32 %v815, 2147483648
    %v818 = vxor.u32 %v816, 2147483648
    %v819 = vmul.f32 %v817, 1.442695
    %v820 = vpow.pop %v819
    %v821 = vmul.f32 %v818, 1.442695
    %v822 = vpow.pop %v821
    %v823 = vadd.f32 %v820, 1.0
    %v824 = vadd.f32 %v822, 1.0
    %v825 = vrcp.pop %v823
    %v826 = vmul.f32 %v823, %v825
    %v827 = vsub.f32 1.0, %v826
    %v828 = vmul.f32 %v825, %v827
    %v829 = vadd.f32 %v825, %v828
    %vm830 = vweird.f32 %v823
    %vm831 = vweird.f32 %v825
    %vm832 = vmor %vm830, %vm831
    %v833 = vsel %vm832, %v825, %v829
    %v834 = vand.u32 2147483647, %v823
    %vm835 = vcmp.eq.f32.partialorder %v834, 8.507059e+37
    %v836 = vand.u32 %v823, 2147483648
    %v837 = vor.u32 1.1754944e-38, %v836
    %v838 = vsel %vm835, %v837, %v833
    %v839 = vmul.f32 1.0, %v838
    %v840 = vrcp.pop %v824
    %v841 = vmul.f32 %v824, %v840
    %v842 = vsub.f32 1.0, %v841
    %v843 = vmul.f32 %v840, %v842
    %v844 = vadd.f32 %v840, %v843
    %vm845 = vweird.f32 %v824
    %vm846 = vweird.f32 %v840
    %vm847 = vmor %vm845, %vm846
    %v848 = vsel %vm847, %v840, %v844
    %v849 = vand.u32 2147483647, %v824
    %vm850 = vcmp.eq.f32.partialorder %v849, 8.507059e+37
    %v851 = vand.u32 %v824, 2147483648
    %v852 = vor.u32 1.1754944e-38, %v851
    %v853 = vsel %vm850, %v852, %v848
    %v854 = vmul.f32 1.0, %v853
    %v855 = vtanh.pop %v816
    %v856 = vmul.f32 %v839, %v767
    %v857 = vmul.f32 %v839, %v855
    %859 = vrot.lane.b32.xlu0 %v857, 64
    %v860 = vpop.permute.xlu0 %859
    %v862 = vadd.f32 %v856, %v860
    %v863 = vtanh.pop %v862
    %v864 = vmul.f32 %v854, %v863
    %866 = vrot.lane.b32.xlu0 %v864, 64
    %v867 = vpop.permute.xlu0 %866
    %v868 = vsel %vm292, %v867, 0
    %870 = vmatpush.msra.mxu0 0.0
    %871 = vmatpush.msra.mxu0 0.0
    %872 = vmatpush.msra.mxu0 0.0
    %873 = vmatpush.msra.mxu0 0.0
    %874 = vmatpush.msra.mxu0 0.0
    %875 = vmatpush.msra.mxu0 0.0
    %876 = vmatpush.msra.mxu0 0.0
    %877 = vmatpush.msra.mxu0 0.0
    %878 = vmatpush.msra.mxu0 %v231
    %879 = vmatpush.msra.mxu0 %v229
    %880 = vmatpush.msra.mxu0 %v227
    %881 = vmatpush.msra.mxu0 %v225
    %882 = vmatpush.msra.mxu0 %v223
    %883 = vmatpush.msra.mxu0 %v221
    %884 = vmatpush.msra.mxu0 %v219
    %885 = vmatpush.msra.mxu0 %v217
    %886 = vmatmul.f32.gmra.mxu0 %v868
    %v887 = vpop.f32.mrf.mxu0
    %v888 = vadd.f32 0.0, %v887
    %889 = vdwg.mxu0
    %890 = vmatpush.msra.mxu0 0.0
    %891 = vmatpush.msra.mxu0 0.0
    %892 = vmatpush.msra.mxu0 0.0
    %893 = vmatpush.msra.mxu0 0.0
    %894 = vmatpush.msra.mxu0 0.0
    %895 = vmatpush.msra.mxu0 0.0
    %896 = vmatpush.msra.mxu0 0.0
    %897 = vmatpush.msra.mxu0 0.0
    %898 = vmatpush.msra.mxu0 %v232
    %899 = vmatpush.msra.mxu0 %v230
    %900 = vmatpush.msra.mxu0 %v228
    %901 = vmatpush.msra.mxu0 %v226
    %902 = vmatpush.msra.mxu0 %v224
    %903 = vmatpush.msra.mxu0 %v222
    %904 = vmatpush.msra.mxu0 %v220
    %905 = vmatpush.msra.mxu0 %v218
    %906 = vmatmul.f32.gmra.mxu0 %v868
    %v907 = vpop.f32.mrf.mxu0
    %v908 = vadd.f32 0.0, %v907
    %909 = vdwg.mxu0
    %v910 = vadd.f32 %v174, %v888
    %v911 = vadd.f32 %v215, %v908
    %v912 = vxor.u32 %v910, 2147483648
    %v913 = vxor.u32 %v911, 2147483648
    %v914 = vmul.f32 %v912, 1.442695
    %v915 = vpow.pop %v914
    %v916 = vmul.f32 %v913, 1.442695
    %v917 = vpow.pop %v916
    %v918 = vadd.f32 %v915, 1.0
    %v919 = vadd.f32 %v917, 1.0
    %v920 = vrcp.pop %v918
    %v921 = vmul.f32 %v918, %v920
    %v922 = vsub.f32 1.0, %v921
    %v923 = vmul.f32 %v920, %v922
    %v924 = vadd.f32 %v920, %v923
    %vm925 = vweird.f32 %v918
    %vm926 = vweird.f32 %v920
    %vm927 = vmor %vm925, %vm926
    %v928 = vsel %vm927, %v920, %v924
    %v929 = vand.u32 2147483647, %v918
    %vm930 = vcmp.eq.f32.partialorder %v929, 8.507059e+37
    %v931 = vand.u32 %v918, 2147483648
    %v932 = vor.u32 1.1754944e-38, %v931
    %v933 = vsel %vm930, %v932, %v928
    %v934 = vmul.f32 1.0, %v933
    %v935 = vrcp.pop %v919
    %v936 = vmul.f32 %v919, %v935
    %v937 = vsub.f32 1.0, %v936
    %v938 = vmul.f32 %v935, %v937
    %v939 = vadd.f32 %v935, %v938
    %vm940 = vweird.f32 %v919
    %vm941 = vweird.f32 %v935
    %vm942 = vmor %vm940, %vm941
    %v943 = vsel %vm942, %v935, %v939
    %v944 = vand.u32 2147483647, %v919
    %vm945 = vcmp.eq.f32.partialorder %v944, 8.507059e+37
    %v946 = vand.u32 %v919, 2147483648
    %v947 = vor.u32 1.1754944e-38, %v946
    %v948 = vsel %vm945, %v947, %v943
    %v949 = vmul.f32 1.0, %v948
    %v950 = vtanh.pop %v911
    %v951 = vmul.f32 %v934, %v862
    %v952 = vmul.f32 %v934, %v950
    %954 = vrot.lane.b32.xlu0 %v952, 64
    %v955 = vpop.permute.xlu0 %954
    %v957 = vadd.f32 %v951, %v955
    %v958 = vtanh.pop %v957
    %v959 = vmul.f32 %v949, %v958
    %961 = vrot.lane.b32.xlu0 %v959, 64
    %v962 = vpop.permute.xlu0 %961
    %v963 = vsel %vm292, %v962, 0
    %965 = vmatpush.msra.mxu0 0.0
    %966 = vmatpush.msra.mxu0 0.0
    %967 = vmatpush.msra.mxu0 0.0
    %968 = vmatpush.msra.mxu0 0.0
    %969 = vmatpush.msra.mxu0 0.0
    %970 = vmatpush.msra.mxu0 0.0
    %971 = vmatpush.msra.mxu0 0.0
    %972 = vmatpush.msra.mxu0 0.0
    %973 = vmatpush.msra.mxu0 %v231
    %974 = vmatpush.msra.mxu0 %v229
    %975 = vmatpush.msra.mxu0 %v227
    %976 = vmatpush.msra.mxu0 %v225
    %977 = vmatpush.msra.mxu0 %v223
    %978 = vmatpush.msra.mxu0 %v221
    %979 = vmatpush.msra.mxu0 %v219
    %980 = vmatpush.msra.mxu0 %v217
    %981 = vmatmul.f32.gmra.mxu0 %v963
    %v982 = vpop.f32.mrf.mxu0
    %v983 = vadd.f32 0.0, %v982
    %984 = vdwg.mxu0
    %985 = vmatpush.msra.mxu0 0.0
    %986 = vmatpush.msra.mxu0 0.0
    %987 = vmatpush.msra.mxu0 0.0
    %988 = vmatpush.msra.mxu0 0.0
    %989 = vmatpush.msra.mxu0 0.0
    %990 = vmatpush.msra.mxu0 0.0
    %991 = vmatpush.msra.mxu0 0.0
    %992 = vmatpush.msra.mxu0 0.0
    %993 = vmatpush.msra.mxu0 %v232
    %994 = vmatpush.msra.mxu0 %v230
    %995 = vmatpush.msra.mxu0 %v228
    %996 = vmatpush.msra.mxu0 %v226
    %997 = vmatpush.msra.mxu0 %v224
    %998 = vmatpush.msra.mxu0 %v222
    %999 = vmatpush.msra.mxu0 %v220
    %1000 = vmatpush.msra.mxu0 %v218
    %1001 = vmatmul.f32.gmra.mxu0 %v963
    %v1002 = vpop.f32.mrf.mxu0
    %v1003 = vadd.f32 0.0, %v1002
    %1004 = vdwg.mxu0
    %v1005 = vadd.f32 %v174, %v983
    %v1006 = vadd.f32 %v215, %v1003
    %v1007 = vxor.u32 %v1005, 2147483648
    %v1008 = vxor.u32 %v1006, 2147483648
    %v1009 = vmul.f32 %v1007, 1.442695
    %v1010 = vpow.pop %v1009
    %v1011 = vmul.f32 %v1008, 1.442695
    %v1012 = vpow.pop %v1011
    %v1013 = vadd.f32 %v1010, 1.0
    %v1014 = vadd.f32 %v1012, 1.0
    %v1015 = vrcp.pop %v1013
    %v1016 = vmul.f32 %v1013, %v1015
    %v1017 = vsub.f32 1.0, %v1016
    %v1018 = vmul.f32 %v1015, %v1017
    %v1019 = vadd.f32 %v1015, %v1018
    %vm1020 = vweird.f32 %v1013
    %vm1021 = vweird.f32 %v1015
    %vm1022 = vmor %vm1020, %vm1021
    %v1023 = vsel %vm1022, %v1015, %v1019
    %v1024 = vand.u32 2147483647, %v1013
    %vm1025 = vcmp.eq.f32.partialorder %v1024, 8.507059e+37
    %v1026 = vand.u32 %v1013, 2147483648
    %v1027 = vor.u32 1.1754944e-38, %v1026
    %v1028 = vsel %vm1025, %v1027, %v1023
    %v1029 = vmul.f32 1.0, %v1028
    %v1030 = vrcp.pop %v1014
    %v1031 = vmul.f32 %v1014, %v1030
    %v1032 = vsub.f32 1.0, %v1031
    %v1033 = vmul.f32 %v1030, %v1032
    %v1034 = vadd.f32 %v1030, %v1033
    %vm1035 = vweird.f32 %v1014
    %vm1036 = vweird.f32 %v1030
    %vm1037 = vmor %vm1035, %vm1036
    %v1038 = vsel %vm1037, %v1030, %v1034
    %v1039 = vand.u32 2147483647, %v1014
    %vm1040 = vcmp.eq.f32.partialorder %v1039, 8.507059e+37
    %v1041 = vand.u32 %v1014, 2147483648
    %v1042 = vor.u32 1.1754944e-38, %v1041
    %v1043 = vsel %vm1040, %v1042, %v1038
    %v1044 = vmul.f32 1.0, %v1043
    %v1045 = vtanh.pop %v1006
    %v1046 = vmul.f32 %v1029, %v957
    %v1047 = vmul.f32 %v1029, %v1045
    %1049 = vrot.lane.b32.xlu0 %v1047, 64
    %v1050 = vpop.permute.xlu0 %1049
    %v1052 = vadd.f32 %v1046, %v1050
    %v1053 = vtanh.pop %v1052
    %v1054 = vmul.f32 %v1044, %v1053
    %1056 = vrot.lane.b32.xlu0 %v957, 64
    %v1057 = vpop.permute.xlu0 %1056
    %1060 = vrot.lane.b32.xlu0 %v1052, 64
    %v1061 = vpop.permute.xlu0 %1060
    %v1063 = vsel %vm233, %v1057, %v1061
    %1066 = vrot.lane.b32.xlu0 %v1054, 64
    %v1067 = vpop.permute.xlu0 %1066
    %v1069 = vsel %vm233, %v962, %v1067
    %1071 = vrot.lane.b32.xlu0 %v1063, 64
    %v1072 = vpop.permute.xlu0 %1071
    %v1074 = vsel %vm292, %v1069, %v1072
    %1075 = vst [vmem:[%s3] sm:$0xff] %v1074
    // Predicated region
    $region22: #{encoder_forward.1} parent=1 // pred_check
      _
    $region23: #{encoder_forward.1} parent=1 // pred_check_branch
      %1077 = sbr.rel (0) target = $region25
    $region24: #{encoder_forward.1} parent=1 // pred_region
      _
    $region25: #{encoder_forward.1} parent=1 // pred_fallthru
      _
    // Predicated region
    $region26: #{encoder_forward.1} parent=1 // pred_check
      _
    $region27: #{encoder_forward.1} parent=1 // pred_check_branch
      %1079 = sbr.rel (0) target = $region29
    $region28: #{encoder_forward.1} parent=1 // pred_region
      _
    $region29: #{encoder_forward.1} parent=1 // pred_fallthru
      _
    %1080 = vsyncpa [#allocation3], 1
    %1081 = vsyncpa [#allocation5], 1

</llo_original>
